<compile_context>
chip_gen: v5e
topology: v5e:2x2
jax: 0.10.0
libtpu: 0.0.40
codegen_flags: <defaults>
</compile_context>

<pallas_src>
import jax
import jax.numpy as jnp
from jax import lax
from jax.experimental import pallas as pl
from jax.experimental.pallas import tpu as pltpu

BN_EPS = 1e-5


def _round_up(x, m):
    return ((x + m - 1) // m) * m


# ---------------------------------------------------------------------------
# Kernel
# ---------------------------------------------------------------------------
def _mlp_kernel(x_ref, wt_ref, gb_ref, o_ref):
    """Grid = (C_out tiles, K tiles); K innermost ("arbitrary").

    x_ref:  (N, tk)  bf16   activation slab (full batch)
    wt_ref: (tk, tn) bf16   pre-transposed weight tile -> canonical [M,K]x[K,N]
    gb_ref: (2, tn)  f32    row 0 = gamma, row 1 = beta
    o_ref:  (N, tn)  f32    output tile; doubles as the f32 accumulator because its
                            block index ignores k (VMEM-resident across the K loop).
    """
    k = pl.program_id(1)

    @pl.when(k == 0)
    def _init():
        o_ref[...] = jnp.zeros_like(o_ref)

    o_ref[...] += jnp.dot(
        x_ref[...], wt_ref[...], preferred_element_type=jnp.float32
    )

    @pl.when(k == pl.num_programs(1) - 1)
    def _finalize():
        h = o_ref[...]                                        # (N, tn) f32
        inv_n = 1.0 / h.shape[0]
        # Two-pass centered variance (robust against cancellation); the Linear bias is
        # intentionally absent -- it would be absorbed by the mean anyway.
        mean = jnp.sum(h, axis=0, keepdims=True) * inv_n
        centered = h - mean
        var = jnp.sum(centered * centered, axis=0, keepdims=True) * inv_n
        scale = gb_ref[0:1, :] * lax.rsqrt(var + BN_EPS)
        # Note: N=1 (or var==0) degenerates to max(beta, 0); PyTorch raises for N=1
        # in training mode, so callers should not rely on that path.
        o_ref[...] = jnp.maximum(centered * scale + gb_ref[1:2, :], 0.0).astype(
            o_ref.dtype
        )


# ---------------------------------------------------------------------------
# Planning + one-time parameter prep
# ---------------------------------------------------------------------------
def plan_mlp(n, c_in, c_out):
    """Pick lane-dense tiles and an explicit VMEM limit, aware of the chip's VMEM."""
    try:
        vmem_cap = int(pltpu.get_tpu_info().vmem_capacity_bytes)
    except Exception:
        vmem_cap = 64 << 20  # conservative fallback (v7x per-TensorCore)
    budget = int(vmem_cap * 0.7)

    c_in_128 = _round_up(c_in, 128)
    c_out_128 = _round_up(c_out, 128)

    # tn: bigger tile raises arithmetic intensity (x is re-streamed once per output
    # tile). 512 on 128 MiB chips (v5e/v6e); 256 on v7x (64 MiB, already near the
    # compute roofline at its 3.2 TB/s HBM).
    tn = min(512 if vmem_cap >= (96 << 20) else 256, c_out_128)

    # tk: keep all of C_in in one K step when the x slab is comfortably small so x is
    # fetched from HBM exactly once; otherwise stream K in 512-wide chunks.
    if n * c_in_128 * 2 <= budget // 4:
        tk = c_in_128
    else:
        tk = min(512, c_in_128)

    def footprint(tk_, tn_):
        return (
            2 * n * tk_ * 2      # x double-buffer (bf16)
            + 2 * tk_ * tn_ * 2  # weight double-buffer (bf16)
            + 2 * 2 * tn_ * 4    # gamma/beta double-buffer (f32)
            + 2 * n * tn_ * 4    # output/accumulator buffers (f32)
        )

    # Footprint scales linearly with N -- shrink tiles before hitting the budget.
    while footprint(tk, tn) > budget and (tk > 256 or tn > 128):
        if tk > 256:
            tk = max(256, _round_up(tk // 2, 128))
        elif tn > 128:
            tn = max(128, _round_up(tn // 2, 128))

    c_in_p = _round_up(c_in_128, tk)
    c_out_p = _round_up(c_out_128, tn)
    vmem_limit = min(
        max(int(footprint(tk, tn) * 1.3) + (2 << 20), 32 << 20),
        int(vmem_cap * 0.9),
    )
    return dict(
        n=n, c_in=c_in, c_out=c_out,
        tk=tk, tn=tn, c_in_p=c_in_p, c_out_p=c_out_p,
        vmem_limit=vmem_limit,
    )


def prepare_params(weight, gamma, beta, plan):
    """One-time pad/cast/transpose of static parameters (hoisted out of the per-call
    path). The Linear bias is deliberately dropped: bias followed by train-mode
    BatchNorm cancels exactly, so the kernel never needs it."""
    c_out, c_in = weight.shape
    c_in_p, c_out_p = plan["c_in_p"], plan["c_out_p"]
    w_t = (
        jnp.pad(weight, ((0, c_out_p - c_out), (0, c_in_p - c_in)))
        .T.astype(jnp.bfloat16)
    )  # (C_in_p, C_out_p)
    gb = jnp.stack(
        [jnp.pad(gamma, (0, c_out_p - c_out)), jnp.pad(beta, (0, c_out_p - c_out))]
    ).astype(jnp.float32)  # (2, C_out_p)
    return w_t, gb


# ---------------------------------------------------------------------------
# Forward
# ---------------------------------------------------------------------------
def mlp_forward(x, w_t, gb, plan):
    """x: (N, C_in) f32; w_t: (C_in_p, C_out_p) bf16; gb: (2, C_out_p) f32."""
    n, c_in = x.shape
    tk, tn = plan["tk"], plan["tn"]
    c_in_p, c_out_p = plan["c_in_p"], plan["c_out_p"]

    # Only the activation is padded/cast per call. The batch dim is NOT padded so the
    # BN statistics stay exact; padded feature columns come out exactly zero.
    x_p = jnp.pad(x, ((0, 0), (0, c_in_p - c_in))).astype(jnp.bfloat16)

    grid = (c_out_p // tn, c_in_p // tk)

    out_padded = pl.pallas_call(
        _mlp_kernel,
        out_shape=jax.ShapeDtypeStruct((n, c_out_p), jnp.float32),
        grid_spec=pltpu.PrefetchScalarGridSpec(
            num_scalar_prefetch=0,
            grid=grid,
            in_specs=[
                pl.BlockSpec((n, tk), lambda j, k: (0, k)),   # x slab (full batch)
                pl.BlockSpec((tk, tn), lambda j, k: (k, j)),  # pre-transposed weight
                pl.BlockSpec((2, tn), lambda j, k: (0, j)),   # packed gamma/beta
            ],
            out_specs=pl.BlockSpec((n, tn), lambda j, k: (0, j)),
        ),
        compiler_params=pltpu.CompilerParams(
            # On v7x megacore sharding needs grid dim 0 >= 2; with C_out <= tn the
            # second TensorCore idles (acceptable at these shapes).
            dimension_semantics=("parallel", "arbitrary"),
            vmem_limit_bytes=plan["vmem_limit"],
        ),
    )(x_p, w_t, gb)

    return out_padded[:, : plan["c_out"]]


# ---------------------------------------------------------------------------
# Reference (mirrors the PyTorch module, including the Linear bias)
# ---------------------------------------------------------------------------
def reference_forward(x, weight, bias, gamma, beta):
    h = jnp.dot(
        x.astype(jnp.bfloat16),
        weight.astype(jnp.bfloat16).T,
        preferred_element_type=jnp.float32,
    ) + bias
    mean = jnp.mean(h, axis=0, keepdims=True)
    var = jnp.mean((h - mean) ** 2, axis=0, keepdims=True)
    y = (h - mean) / jnp.sqrt(var + BN_EPS) * gamma + beta
    return jnp.maximum(y, 0.0)


if __name__ == "__main__":
    key = jax.random.PRNGKey(0)
    k_x, k_w, k_b, k_g, k_be = jax.random.split(key, 5)

    N, C_IN, C_OUT = 8, 32, 64

    x = jax.random.normal(k_x, (N, C_IN), dtype=jnp.float32)
    bound = 1.0 / (C_IN ** 0.5)
    weight = jax.random.uniform(
        k_w, (C_OUT, C_IN), minval=-bound, maxval=bound, dtype=jnp.float32
    )
    bias = jax.random.uniform(
        k_b, (C_OUT,), minval=-bound, maxval=bound, dtype=jnp.float32
    )
    gamma = 1.0 + 0.1 * jax.random.normal(k_g, (C_OUT,), dtype=jnp.float32)
    beta = 0.1 * jax.random.normal(k_be, (C_OUT,), dtype=jnp.float32)

    plan = plan_mlp(N, C_IN, C_OUT)
    w_t, gb = prepare_params(weight, gamma, beta, plan)  # one-time param prep

    out = mlp_forward(x, w_t, gb, plan)
    jax.block_until_ready(out)

    ref = reference_forward(x, weight, bias, gamma, beta)
    assert out.shape == (N, C_OUT)
    assert jnp.allclose(out, ref, atol=1e-3, rtol=1e-3), "mismatch vs reference"

    print("KERNEL_OK")
</pallas_src>

<mosaic_0001>
module attributes {stable_mosaic.version = 11 : i64} {
  func.func @_mlp_kernel(%arg0: i32, %arg1: i32, %arg2: memref<8x128xbf16, #tpu.memory_space<vmem>>, %arg3: memref<128x128xbf16, #tpu.memory_space<vmem>>, %arg4: memref<2x128xf32, #tpu.memory_space<vmem>>, %arg5: memref<8x128xf32, #tpu.memory_space<vmem>>) attributes {dimension_semantics = [#tpu.dimension_semantics<parallel>, #tpu.dimension_semantics<arbitrary>], iteration_bounds = array<i64: 1, 1>, scalar_prefetch = 0 : i64, scratch_operands = 0 : i64, tpu.core_type = #tpu.core_type<tc>, window_params = [{transform_indices = @transform_0, window_bounds = array<i64: 8, 128>}, {transform_indices = @transform_1, window_bounds = array<i64: 128, 128>}, {transform_indices = @transform_2, window_bounds = array<i64: 2, 128>}, {transform_indices = @transform_3, window_bounds = array<i64: 8, 128>}]} {
    %c0_i32 = arith.constant 0 : i32
    %0 = arith.cmpi eq, %arg1, %c0_i32 : i32
    %1 = arith.extui %0 : i1 to i32
    %c0_i32_0 = arith.constant 0 : i32
    %2 = arith.cmpi ne, %1, %c0_i32_0 : i32
    scf.if %2 {
      %cst_10 = arith.constant 0.000000e+00 : f32
      %12 = vector.broadcast %cst_10 : f32 to vector<8x128xf32>
      %c0_11 = arith.constant 0 : index
      %c0_12 = arith.constant 0 : index
      %13 = vector.load %arg5[%c0_11, %c0_12] : memref<8x128xf32, #tpu.memory_space<vmem>>, vector<8x128xf32>
      tpu.vector_store %arg5[%c0_11, %c0_12], %12 {strides = array<i32>} : memref<8x128xf32, #tpu.memory_space<vmem>>, vector<8x128xf32>,
    } else {
    }
    %c0 = arith.constant 0 : index
    %c0_1 = arith.constant 0 : index
    %3 = vector.load %arg5[%c0, %c0_1] : memref<8x128xf32, #tpu.memory_space<vmem>>, vector<8x128xf32>
    %c0_2 = arith.constant 0 : index
    %c0_3 = arith.constant 0 : index
    %4 = vector.load %arg2[%c0_2, %c0_3] : memref<8x128xbf16, #tpu.memory_space<vmem>>, vector<8x128xbf16>
    %c0_4 = arith.constant 0 : index
    %c0_5 = arith.constant 0 : index
    %5 = vector.load %arg3[%c0_4, %c0_5] : memref<128x128xbf16, #tpu.memory_space<vmem>>, vector<128x128xbf16>
    %cst = arith.constant dense<0.000000e+00> : vector<8x128xf32>
    %6 = tpu.matmul %4, %5, %cst {dimension_numbers = #tpu.dot_dimension_numbers<[1], [0], [0], [1], [0, 0, 1, 1], [], []>} : vector<8x128xbf16>, vector<128x128xbf16>, vector<8x128xf32> -> vector<8x128xf32>
    %7 = arith.addf %3, %6 : vector<8x128xf32>
    %c0_6 = arith.constant 0 : index
    %c0_7 = arith.constant 0 : index
    %8 = vector.load %arg5[%c0_6, %c0_7] : memref<8x128xf32, #tpu.memory_space<vmem>>, vector<8x128xf32>
    tpu.vector_store %arg5[%c0_6, %c0_7], %7 {strides = array<i32>} : memref<8x128xf32, #tpu.memory_space<vmem>>, vector<8x128xf32>,
    %c0_i32_8 = arith.constant 0 : i32
    %9 = arith.cmpi eq, %arg1, %c0_i32_8 : i32
    %10 = arith.extui %9 : i1 to i32
    %c0_i32_9 = arith.constant 0 : i32
    %11 = arith.cmpi ne, %10, %c0_i32_9 : i32
    scf.if %11 {
      %c0_10 = arith.constant 0 : index
      %c0_11 = arith.constant 0 : index
      %12 = vector.load %arg5[%c0_10, %c0_11] : memref<8x128xf32, #tpu.memory_space<vmem>>, vector<8x128xf32>
      %cst_12 = arith.constant dense<0.000000e+00> : vector<128xf32>
      %13 = vector.multi_reduction <add>, %12, %cst_12 [0] : vector<8x128xf32> to vector<128xf32>
      %14 = vector.shape_cast %13 : vector<128xf32> to vector<1x128xf32>
      %cst_13 = arith.constant 1.250000e-01 : f32
      %15 = vector.broadcast %cst_13 : f32 to vector<1x128xf32>
      %16 = arith.mulf %14, %15 : vector<1x128xf32>
      %17 = vector.broadcast %16 : vector<1x128xf32> to vector<8x128xf32>
      %18 = arith.subf %12, %17 : vector<8x128xf32>
      %19 = arith.mulf %18, %18 : vector<8x128xf32>
      %cst_14 = arith.constant dense<0.000000e+00> : vector<128xf32>
      %20 = vector.multi_reduction <add>, %19, %cst_14 [0] : vector<8x128xf32> to vector<128xf32>
      %21 = vector.shape_cast %20 : vector<128xf32> to vector<1x128xf32>
      %cst_15 = arith.constant 1.250000e-01 : f32
      %22 = vector.broadcast %cst_15 : f32 to vector<1x128xf32>
      %23 = arith.mulf %21, %22 : vector<1x128xf32>
      %c0_16 = arith.constant 0 : index
      %c0_17 = arith.constant 0 : index
      %24 = vector.load %arg4[%c0_16, %c0_17] : memref<2x128xf32, #tpu.memory_space<vmem>>, vector<1x128xf32>
      %cst_18 = arith.constant 9.99999974E-6 : f32
      %25 = vector.broadcast %cst_18 : f32 to vector<1x128xf32>
      %26 = arith.addf %23, %25 : vector<1x128xf32>
      %27 = math.rsqrt %26 : vector<1x128xf32>
      %28 = arith.mulf %24, %27 : vector<1x128xf32>
      %29 = vector.broadcast %28 : vector<1x128xf32> to vector<8x128xf32>
      %30 = arith.mulf %18, %29 : vector<8x128xf32>
      %c1 = arith.constant 1 : index
      %c0_19 = arith.constant 0 : index
      %31 = vector.load %arg4[%c1, %c0_19] : memref<2x128xf32, #tpu.memory_space<vmem>>, vector<1x128xf32>
      %32 = vector.broadcast %31 : vector<1x128xf32> to vector<8x128xf32>
      %33 = arith.addf %30, %32 : vector<8x128xf32>
      %cst_20 = arith.constant 0.000000e+00 : f32
      %34 = vector.broadcast %cst_20 : f32 to vector<8x128xf32>
      %35 = arith.maximumf %33, %34 : vector<8x128xf32>
      %c0_21 = arith.constant 0 : index
      %c0_22 = arith.constant 0 : index
      %36 = vector.load %arg5[%c0_21, %c0_22] : memref<8x128xf32, #tpu.memory_space<vmem>>, vector<8x128xf32>
      tpu.vector_store %arg5[%c0_21, %c0_22], %35 {strides = array<i32>} : memref<8x128xf32, #tpu.memory_space<vmem>>, vector<8x128xf32>,
    } else {
    }
    return
  }
  func.func @transform_0(%arg0: i32, %arg1: i32) -> (i32, i32) {
    %c0_i32 = arith.constant 0 : i32
    %c0_i32_0 = arith.constant 0 : i32
    return %c0_i32, %arg1 : i32, i32
  }
  func.func @transform_1(%arg0: i32, %arg1: i32) -> (i32, i32) {
    %c0_i32 = arith.constant 0 : i32
    return %arg1, %arg0 : i32, i32
  }
  func.func @transform_2(%arg0: i32, %arg1: i32) -> (i32, i32) {
    %c0_i32 = arith.constant 0 : i32
    %c0_i32_0 = arith.constant 0 : i32
    return %c0_i32, %arg0 : i32, i32
  }
  func.func @transform_3(%arg0: i32, %arg1: i32) -> (i32, i32) {
    %c0_i32 = arith.constant 0 : i32
    %c0_i32_0 = arith.constant 0 : i32
    return %c0_i32, %arg0 : i32, i32
  }
}

</mosaic_0001>

<llo_original>
// kernel: tpu_custom_call.1
$region0: #{tpu_custom_call.1}
  #allocation0 [shape = 'u32[]', space=smem, size = 0x4, offset = 0x4, fixed_abs, tag = 'smem constant byte address 0x4 - core index']
  #allocation1 [shape = 'u32[72,128]{1,0:T(1,128)}', space=vmem, size = 0x9000, scoped, tag = 'internal scratch']
  %s0 = inlined_call_operand.hbm [shape: bf16[8,128], index: 0, kind: input, shape index: {}]
  %s1 = inlined_call_operand.hbm [shape: bf16[128,128], index: 1, kind: input, shape index: {}]
  %s2 = inlined_call_operand.hbm [shape: f32[2,128], index: 2, kind: input, shape index: {}]
  %s3 = inlined_call_operand.hbm [shape: f32[8,128], index: 3, kind: output, shape index: {}]
  %s4 = sld [smem:[#allocation0]]
  $region42: #{tpu_custom_call.1} parent=0
    _
  %s6 = ssub.s32 1, %s4
  %s7 = scalar_select 0, %s6, %s4
  $region1: #{tpu_custom_call.1} parent=0
    #allocation2 [shape = 'u8[2048]{0}', space=vmem, size = 0x800, scoped, tag = 'input window, operand 0, single buffered']
    #allocation3 [shape = 's32[1]{0}', space=sflag, size = 0x4, scoped, tag = 'scoped memory for tpu_custom_call.1']
    #allocation4 [shape = 's32[1]{0}', space=sflag, size = 0x4, scoped, tag = 'scoped memory for tpu_custom_call.1']
    #allocation5 [shape = 'u8[32768]{0}', space=vmem, size = 0x8000, scoped, tag = 'input window, operand 1, single buffered']
    #allocation6 [shape = 's32[1]{0}', space=sflag, size = 0x4, scoped, tag = 'scoped memory for tpu_custom_call.1']
    #allocation7 [shape = 'u8[1024]{0}', space=vmem, size = 0x400, scoped, tag = 'input window, operand 2, single buffered']
    #allocation8 [shape = 'u8[4096]{0}', space=vmem, size = 0x1000, scoped, tag = 'output window, operand 0, single buffered']
    %8 = vsyncpa [#allocation3], 0
    %9 = vsyncpa [#allocation6], 0
    %10 = vsyncpa [#allocation4], 0
    // Predicated region
    $region2: #{tpu_custom_call.1} parent=1 // pred_check
      _
    $region3: #{tpu_custom_call.1} parent=1 // pred_check_branch
      %12 = sbr.rel (0) target = $region5
    $region4: #{tpu_custom_call.1} parent=1 // pred_region
      %14 = vsyncadd [#allocation3], 0
      %s16 = sshll.u32 %s0, 4
      %s17 = int_to_ptr.hbm [resolvable:$true] %s16
      %s18 = sshll.u32 [#allocation2], 4
      %s19 = int_to_ptr.vmem [resolvable:$true] %s18
      %21 = dma.hbm_to_vmem [thread:$0]  %s17, 64, %s19, [#allocation3]
    $region5: #{tpu_custom_call.1} parent=1 // pred_fallthru
      _
    // Predicated region
    $region6: #{tpu_custom_call.1} parent=1 // pred_check
      _
    $region7: #{tpu_custom_call.1} parent=1 // pred_check_branch
      %23 = sbr.rel (0) target = $region9
    $region8: #{tpu_custom_call.1} parent=1 // pred_region
      %25 = vsyncadd [#allocation6], 0
      %s26 = sshll.u32 %s1, 4
      %s27 = int_to_ptr.hbm [resolvable:$true] %s26
      %s28 = sshll.u32 [#allocation5], 4
      %s29 = int_to_ptr.vmem [resolvable:$true] %s28
      %34 = dma.hbm_to_vmem [thread:$0]  %s27, 1024, %s29, [#allocation6], 64, 64, 4
    $region9: #{tpu_custom_call.1} parent=1 // pred_fallthru
      _
    // Predicated region
    $region10: #{tpu_custom_call.1} parent=1 // pred_check
      _
    $region11: #{tpu_custom_call.1} parent=1 // pred_check_branch
      %36 = sbr.rel (0) target = $region13
    $region12: #{tpu_custom_call.1} parent=1 // pred_region
      %38 = vsyncadd [#allocation6], 0
      %s40 = sshll.u32 %s2, 4
      %s41 = int_to_ptr.hbm [resolvable:$true] %s40
      %s42 = sshll.u32 [#allocation7], 4
      %s43 = int_to_ptr.vmem [resolvable:$true] %s42
      %45 = dma.hbm_to_vmem [thread:$0]  %s41, 32, %s43, [#allocation6]
    $region13: #{tpu_custom_call.1} parent=1 // pred_fallthru
      _
    // Predicated region
    $region14: #{tpu_custom_call.1} parent=1 // pred_check
      _
    $region15: #{tpu_custom_call.1} parent=1 // pred_check_branch
      %47 = sbr.rel (0) target = $region17
    $region16: #{tpu_custom_call.1} parent=1 // pred_region
      %49 = dma.done [#allocation3], 64
    $region17: #{tpu_custom_call.1} parent=1 // pred_fallthru
      _
    // Predicated region
    $region18: #{tpu_custom_call.1} parent=1 // pred_check
      _
    $region19: #{tpu_custom_call.1} parent=1 // pred_check_branch
      %51 = sbr.rel (0) target = $region21
    $region20: #{tpu_custom_call.1} parent=1 // pred_region
      %53 = dma.done [#allocation6], 1024
    $region21: #{tpu_custom_call.1} parent=1 // pred_fallthru
      _
    // Predicated region
    $region22: #{tpu_custom_call.1} parent=1 // pred_check
      _
    $region23: #{tpu_custom_call.1} parent=1 // pred_check_branch
      %55 = sbr.rel (0) target = $region25
    $region24: #{tpu_custom_call.1} parent=1 // pred_region
      %57 = dma.done [#allocation6], 32
    $region25: #{tpu_custom_call.1} parent=1 // pred_fallthru
      _
    %p58 = scmp.eq.s32.totalorder 0, 0
    // Predicated region
    $region26: #{tpu_custom_call.1} parent=1 // pred_check
      %p59 = pneg %p58
    $region27: #{tpu_custom_call.1} parent=1 // pred_check_branch
      %61 = sbr.rel (%p59) target = $region29
    $region28: #{tpu_custom_call.1} parent=1 // pred_region
      %62 = vst [vmem:[#allocation8] sm:$0xff] 0.0
    $region29: #{tpu_custom_call.1} parent=1 // pred_fallthru
      _
    %v63 = vld [vmem:[#allocation8] sm:$0xff]
    %v64 = vld [vmem:[#allocation2] sm:$0xf]
    %v65 = vld [vmem:[#allocation5] sm:$0xf]
    %v66 = vld [vmem:[#allocation5 + $0x4] sm:$0xf]
    %v67 = vld [vmem:[#allocation5 + $0x8] sm:$0xf]
    %v68 = vld [vmem:[#allocation5 + $0xc] sm:$0xf]
    %v69 = vld [vmem:[#allocation5 + $0x10] sm:$0xf]
    %v70 = vld [vmem:[#allocation5 + $0x14] sm:$0xf]
    %v71 = vld [vmem:[#allocation5 + $0x18] sm:$0xf]
    %v72 = vld [vmem:[#allocation5 + $0x1c] sm:$0xf]
    %v73 = vld [vmem:[#allocation5 + $0x20] sm:$0xf]
    %v74 = vld [vmem:[#allocation5 + $0x24] sm:$0xf]
    %v75 = vld [vmem:[#allocation5 + $0x28] sm:$0xf]
    %v76 = vld [vmem:[#allocation5 + $0x2c] sm:$0xf]
    %v77 = vld [vmem:[#allocation5 + $0x30] sm:$0xf]
    %v78 = vld [vmem:[#allocation5 + $0x34] sm:$0xf]
    %v79 = vld [vmem:[#allocation5 + $0x38] sm:$0xf]
    %v80 = vld [vmem:[#allocation5 + $0x3c] sm:$0xf]
    %v97 = vunpack.c.l.b16 %v65
    %v98 = vunpack.c.l.b16 %v66
    %v99 = vunpack.c.l.b16 %v67
    %v100 = vunpack.c.l.b16 %v68
    %v101 = vunpack.c.l.b16 %v69
    %v102 = vunpack.c.l.b16 %v70
    %v103 = vunpack.c.l.b16 %v71
    %v104 = vunpack.c.l.b16 %v72
    %v105 = vunpack.c.l.b16 %v73
    %v106 = vunpack.c.l.b16 %v74
    %v107 = vunpack.c.l.b16 %v75
    %v108 = vunpack.c.l.b16 %v76
    %v109 = vunpack.c.l.b16 %v77
    %v110 = vunpack.c.l.b16 %v78
    %v111 = vunpack.c.l.b16 %v79
    %v112 = vunpack.c.l.b16 %v80
    %v113 = vpack.c.b16 %v98, %v97
    %v114 = vpack.c.b16 %v100, %v99
    %v115 = vpack.c.b16 %v102, %v101
    %v116 = vpack.c.b16 %v104, %v103
    %v117 = vpack.c.b16 %v106, %v105
    %v118 = vpack.c.b16 %v108, %v107
    %v119 = vpack.c.b16 %v110, %v109
    %v120 = vpack.c.b16 %v112, %v111
    %129 = vmatpush.bf16.msra.mxu0 %v120
    %130 = vmatpush.bf16.msra.mxu0 %v119
    %131 = vmatpush.bf16.msra.mxu0 %v118
    %132 = vmatpush.bf16.msra.mxu0 %v117
    %133 = vmatpush.bf16.msra.mxu0 %v116
    %134 = vmatpush.bf16.msra.mxu0 %v115
    %135 = vmatpush.bf16.msra.mxu0 %v114
    %136 = vmatpush.bf16.msra.mxu0 %v113
    %137 = vmatmul.bf16.gmra.mxu0 %v64
    %v138 = vpop.f32.mrf.mxu0
    %v139 = vadd.f32 0.0, %v138
    %v140 = vpop.f32.mrf.mxu0
    %141 = vdwg.mxu0
    %v142 = vadd.f32 %v63, %v139
    %143 = vst [vmem:[#allocation8] sm:$0xff] %v142
    // Predicated region
    $region30: #{tpu_custom_call.1} parent=1 // pred_check
      %p144 = pneg %p58
    $region31: #{tpu_custom_call.1} parent=1 // pred_check_branch
      %146 = sbr.rel (%p144) target = $region33
    $region32: #{tpu_custom_call.1} parent=1 // pred_region
      %v147 = vld [vmem:[#allocation8] sm:$0xff]
      %v148 = vrot.slane %v147, 4
      %v149 = vadd.f32 %v147, %v148
      %v150 = vrot.slane %v149, 2
      %v151 = vadd.f32 %v149, %v150
      %v152 = vrot.slane %v151, 1
      %v153 = vadd.f32 %v151, %v152
      %v154 = vmul.f32 %v153, 0.125
      %v155 = vsub.f32 %v147, %v154
      %v156 = vmul.f32 %v155, %v155
      %v157 = vrot.slane %v156, 4
      %v158 = vadd.f32 %v156, %v157
      %v159 = vrot.slane %v158, 2
      %v160 = vadd.f32 %v158, %v159
      %v161 = vrot.slane %v160, 1
      %v162 = vadd.f32 %v160, %v161
      %v163 = vmul.f32 %v162, 0.125
      %v164 = vld [vmem:[#allocation7] sm:$0x1]
      %v165 = vadd.f32 %v163, 1e-05
      %v166 = vrsqrt.pop %v165
      %v167 = vmul.f32 %v166, %v165
      %v168 = vmul.f32 %v167, %v166
      %v169 = vmul.f32 0.5, %v168
      %v170 = vsub.f32 1.5, %v169
      %v171 = vmul.f32 %v166, %v170
      %vm172 = vweird.f32 %v165
      %vm173 = vweird.f32 %v166
      %vm174 = vmor %vm172, %vm173
      %v175 = vsel %vm174, %v166, %v171
      %v176 = vmul.f32 %v164, %v175
      %v177 = vperm.slane %v176, 0
      %v178 = vmul.f32 %v155, %v177
      %v179 = vld [vmem:[#allocation7 + $0x1] sm:$0x1]
      %v180 = vperm.slane %v179, 0
      %v181 = vadd.f32 %v178, %v180
      %v182 = vmax.f32 %v181, 0.0
      %183 = vst [vmem:[#allocation8] sm:$0xff] %v182
    $region33: #{tpu_custom_call.1} parent=1 // pred_fallthru
      _
    // Predicated region
    $region34: #{tpu_custom_call.1} parent=1 // pred_check
      _
    $region35: #{tpu_custom_call.1} parent=1 // pred_check_branch
      %185 = sbr.rel (0) target = $region37
    $region36: #{tpu_custom_call.1} parent=1 // pred_region
      %187 = vsyncadd [#allocation4], 0
      %s189 = sshll.u32 [#allocation8], 4
      %s190 = int_to_ptr.vmem [resolvable:$true] %s189
      %s191 = sshll.u32 %s3, 4
      %s192 = int_to_ptr.hbm [resolvable:$true] %s191
      %194 = dma.vmem_to_hbm [thread:$0]  %s190, 128, %s192, [#allocation4]
    $region37: #{tpu_custom_call.1} parent=1 // pred_fallthru
      _
    // Predicated region
    $region38: #{tpu_custom_call.1} parent=1 // pred_check
      _
    $region39: #{tpu_custom_call.1} parent=1 // pred_check_branch
      %196 = sbr.rel (0) target = $region41
    $region40: #{tpu_custom_call.1} parent=1 // pred_region
      %198 = dma.done [#allocation4], 128
    $region41: #{tpu_custom_call.1} parent=1 // pred_fallthru
      _
    %199 = vsyncpa [#allocation3], 1
    %200 = vsyncpa [#allocation6], 1
    %201 = vsyncpa [#allocation4], 1

</llo_original>
